<compile_context>
chip_gen: v7x
topology: tpu7x:2x2x1
jax: 0.10.0
libtpu: 0.0.40
codegen_flags: <defaults>
</compile_context>

<pallas_src>
import math
from functools import partial

import jax
import jax.numpy as jnp
from jax import lax
from jax.experimental import pallas as pl
from jax.experimental.pallas import tpu as pltpu


def _round_up(x, n):
    return ((x + n - 1) // n) * n


def _adapter_kernel(x_ref, w1_ref, b1_ref, w2_ref, b2_ref, o_ref):
    # x_ref:  (tm, D_in)     VMEM, native dtype
    # w1_ref: (D_in, Hp)     VMEM, resident (constant index_map)
    # b1_ref: (1, Hp)
    # w2_ref: (Hp, Dp)
    # b2_ref: (1, Dp)
    # o_ref:  (tm, Dp)
    x = x_ref[...]  # keep native dtype -> native bf16 MXU path when applicable
    h = jnp.dot(x, w1_ref[...], preferred_element_type=jnp.float32)
    h = h + b1_ref[...].astype(jnp.float32)
    # exact GELU (nn.GELU default): 0.5*h*(1+erf(h/sqrt(2))); erf runs on EUP.
    h = 0.5 * h * (1.0 + lax.erf(h * (1.0 / math.sqrt(2.0))))
    # cast activations to the weight dtype so a bf16 deployment keeps the
    # fast bf16 MXU path for fc2 as well (no-op for f32 weights).
    y = jnp.dot(h.astype(w2_ref.dtype), w2_ref[...],
                preferred_element_type=jnp.float32)
    y = y + b2_ref[...].astype(jnp.float32)
    o_ref[...] = y.astype(o_ref.dtype)


def prepare_adapter_params(w1, b1, w2, b2):
    """One-time parameter prep (call at init, NOT per forward call).

    Takes torch-layout weights ([out, in]) and returns pre-transposed,
    lane-padded ([in, out_pad]) weights/biases plus the true output width.
    Zero padding keeps the math exact: padded fc1 columns produce gelu(0)=0
    which multiplies zero rows of the padded W2.
    """
    h_dim, d_in = w1.shape
    d_out, _ = w2.shape
    h_p = _round_up(h_dim, 128)
    d_out_p = _round_up(d_out, 128)

    w1_p = jnp.zeros((d_in, h_p), w1.dtype).at[:, :h_dim].set(w1.T)
    b1_p = jnp.zeros((1, h_p), b1.dtype).at[0, :h_dim].set(b1)
    w2_p = jnp.zeros((h_p, d_out_p), w2.dtype).at[:h_dim, :d_out].set(w2.T)
    b2_p = jnp.zeros((1, d_out_p), b2.dtype).at[0, :d_out].set(b2)
    return (w1_p, b1_p, w2_p, b2_p), int(d_out)


# Conservative across v5e/v6e (128 MiB) and v7x (64 MiB physical / 32 scoped).
_VMEM_BUDGET = 40 * 1024 * 1024


def _vmem_estimate(tm, d_in, h_p, d_out_p, in_bytes, out_bytes):
    x_buf = 2 * tm * d_in * in_bytes                         # double-buffered
    o_buf = 2 * tm * d_out_p * out_bytes                     # double-buffered
    w_buf = 2 * (d_in * h_p + h_p * d_out_p + h_p + d_out_p) * in_bytes
    interm = tm * (h_p + d_out_p) * 4                        # f32 intermediates
    return x_buf + o_buf + w_buf + interm


@partial(jax.jit, static_argnames=("d_out", "tm"))
def adapter_v2_forward(x, w1_p, b1_p, w2_p, b2_p, *, d_out, tm=256):
    """x: [batch, seq, D_in]; params from prepare_adapter_params."""
    batch, seq, d_in = x.shape
    h_p = w1_p.shape[1]
    d_out_p = w2_p.shape[1]
    m = batch * seq

    in_bytes = jnp.dtype(x.dtype).itemsize
    # sublane granularity: 8 rows for 4-byte, 16 for 2-byte, 32 for 1-byte.
    sub = 8 * max(1, 4 // in_bytes)

    # Token tile: as large as requested, but no larger than (padded) M and
    # small enough to fit the VMEM budget (matters for v7x's 64 MiB).
    tm_eff = _round_up(min(tm, _round_up(m, sub)), sub)
    while (tm_eff > sub and
           _vmem_estimate(tm_eff, d_in, h_p, d_out_p, in_bytes, in_bytes)
           > _VMEM_BUDGET):
        tm_eff = max(sub, _round_up(tm_eff // 2, sub))

    m_pad = _round_up(m, tm_eff)
    x2d = x.reshape(m, d_in)
    if m_pad != m:
        x2d = jnp.pad(x2d, ((0, m_pad - m), (0, 0)))

    grid = (m_pad // tm_eff,)  # NOTE: >= 2 steps lets both v7x TCs get work.

    vmem_est = _vmem_estimate(tm_eff, d_in, h_p, d_out_p, in_bytes, in_bytes)
    vmem_limit = int(min(max(int(vmem_est * 1.5), 16 * 1024 * 1024),
                         64 * 1024 * 1024))

    cost = pl.CostEstimate(
        flops=2 * m_pad * h_p * (d_in + d_out_p),
        transcendentals=m_pad * h_p,
        bytes_accessed=(m_pad * d_in * in_bytes
                        + (d_in * h_p + h_p * d_out_p + h_p + d_out_p) * in_bytes
                        + m_pad * d_out_p * in_bytes),
    )

    out2d = pl.pallas_call(
        _adapter_kernel,
        out_shape=jax.ShapeDtypeStruct((m_pad, d_out_p), x.dtype),
        grid_spec=pltpu.PrefetchScalarGridSpec(
            num_scalar_prefetch=0,
            grid=grid,
            in_specs=[
                pl.BlockSpec((tm_eff, d_in), lambda i: (i, 0)),     # x tile
                # Weights/biases: constant index_map -> fetched once, resident
                # across grid steps.  (If VMEM-bound on v7x, these could be
                # single-buffered via pipeline_mode=pl.Buffered(1).)
                pl.BlockSpec((d_in, h_p), lambda i: (0, 0)),        # W1
                pl.BlockSpec((1, h_p), lambda i: (0, 0)),           # b1
                pl.BlockSpec((h_p, d_out_p), lambda i: (0, 0)),     # W2
                pl.BlockSpec((1, d_out_p), lambda i: (0, 0)),       # b2
            ],
            out_specs=pl.BlockSpec((tm_eff, d_out_p), lambda i: (i, 0)),
        ),
        compiler_params=pltpu.CompilerParams(
            dimension_semantics=("parallel",),
            vmem_limit_bytes=vmem_limit,
        ),
        cost_estimate=cost,
    )(x2d, w1_p, b1_p, w2_p, b2_p)

    return out2d[:m, :d_out].reshape(batch, seq, d_out)


def _reference(x, w1, b1, w2, b2):
    xf = x.astype(jnp.float32)
    h = jnp.einsum("bsd,hd->bsh", xf, w1.astype(jnp.float32)) \
        + b1.astype(jnp.float32)
    h = 0.5 * h * (1.0 + lax.erf(h / jnp.sqrt(2.0)))
    y = jnp.einsum("bsh,oh->bso", h, w2.astype(jnp.float32)) \
        + b2.astype(jnp.float32)
    return y.astype(x.dtype)


if __name__ == "__main__":
    # small shapes consistent with the module's forward
    batch, seq = 2, 8
    embedding_dim = 32       # args.embedding_dim
    adapter_hidden_dim = 16  # args.adapter_hidden_dim
    lm_hidden_dim = 32       # args.lm_hidden_dim

    key = jax.random.PRNGKey(0)
    kx, k1, kb1, k2, kb2, kx2 = jax.random.split(key, 6)

    x = jax.random.normal(kx, (batch, seq, embedding_dim), dtype=jnp.float32)
    # deterministic parameter init (torch-style [out, in] weight layout)
    w1 = jax.random.normal(k1, (adapter_hidden_dim, embedding_dim),
                           dtype=jnp.float32) * 0.05
    b1 = jax.random.normal(kb1, (adapter_hidden_dim,), dtype=jnp.float32) * 0.01
    w2 = jax.random.normal(k2, (lm_hidden_dim, adapter_hidden_dim),
                           dtype=jnp.float32) * 0.05
    b2 = jax.random.normal(kb2, (lm_hidden_dim,), dtype=jnp.float32) * 0.01

    # one-time (init-time) weight transpose + lane padding
    params, d_out = prepare_adapter_params(w1, b1, w2, b2)

    out = adapter_v2_forward(x, *params, d_out=d_out, tm=256)
    out = jax.block_until_ready(out)
    ref = _reference(x, w1, b1, w2, b2)
    assert out.shape == (batch, seq, lm_hidden_dim)
    assert jnp.allclose(out, ref, atol=1e-5, rtol=1e-5), "mismatch vs reference"

    # exercise the M-remainder path (batch*seq not a multiple of the tile)
    x_odd = jax.random.normal(kx2, (3, 7, embedding_dim), dtype=jnp.float32)
    out_odd = jax.block_until_ready(
        adapter_v2_forward(x_odd, *params, d_out=d_out, tm=256))
    ref_odd = _reference(x_odd, w1, b1, w2, b2)
    assert out_odd.shape == (3, 7, lm_hidden_dim)
    assert jnp.allclose(out_odd, ref_odd, atol=1e-5, rtol=1e-5), \
        "mismatch vs reference (remainder path)"

    print("KERNEL_OK")
</pallas_src>

<mosaic_0001>
module attributes {stable_mosaic.version = 11 : i64} {
  func.func @_adapter_kernel(%arg0: i32, %arg1: memref<16x32xf32, #tpu.memory_space<vmem>>, %arg2: memref<32x128xf32, #tpu.memory_space<vmem>>, %arg3: memref<1x128xf32, #tpu.memory_space<vmem>>, %arg4: memref<128x128xf32, #tpu.memory_space<vmem>>, %arg5: memref<1x128xf32, #tpu.memory_space<vmem>>, %arg6: memref<16x128xf32, #tpu.memory_space<vmem>>) attributes {dimension_semantics = [#tpu.dimension_semantics<parallel>], iteration_bounds = array<i64: 1>, scalar_prefetch = 0 : i64, scratch_operands = 0 : i64, tpu.core_type = #tpu.core_type<tc>, window_params = [{transform_indices = @transform_0, window_bounds = array<i64: 16, 32>}, {pipeline_mode = #tpu.pipeline_mode<synchronous>, transform_indices = @transform_1, window_bounds = array<i64: 32, 128>}, {pipeline_mode = #tpu.pipeline_mode<synchronous>, transform_indices = @transform_2, window_bounds = array<i64: 1, 128>}, {pipeline_mode = #tpu.pipeline_mode<synchronous>, transform_indices = @transform_3, window_bounds = array<i64: 128, 128>}, {pipeline_mode = #tpu.pipeline_mode<synchronous>, transform_indices = @transform_4, window_bounds = array<i64: 1, 128>}, {transform_indices = @transform_5, window_bounds = array<i64: 16, 128>}]} {
    %c0 = arith.constant 0 : index
    %c0_0 = arith.constant 0 : index
    %0 = vector.load %arg1[%c0, %c0_0] : memref<16x32xf32, #tpu.memory_space<vmem>>, vector<16x32xf32>
    %c0_1 = arith.constant 0 : index
    %c0_2 = arith.constant 0 : index
    %1 = vector.load %arg2[%c0_1, %c0_2] : memref<32x128xf32, #tpu.memory_space<vmem>>, vector<32x128xf32>
    %cst = arith.constant dense<0.000000e+00> : vector<16x128xf32>
    %2 = tpu.matmul %0, %1, %cst {dimension_numbers = #tpu.dot_dimension_numbers<[1], [0], [0], [1], [0, 0, 1, 1], [], []>} : vector<16x32xf32>, vector<32x128xf32>, vector<16x128xf32> -> vector<16x128xf32>
    %c0_3 = arith.constant 0 : index
    %c0_4 = arith.constant 0 : index
    %3 = vector.load %arg3[%c0_3, %c0_4] : memref<1x128xf32, #tpu.memory_space<vmem>>, vector<1x128xf32>
    %4 = vector.broadcast %3 : vector<1x128xf32> to vector<16x128xf32>
    %5 = arith.addf %2, %4 : vector<16x128xf32>
    %cst_5 = arith.constant 5.000000e-01 : f32
    %6 = vector.broadcast %cst_5 : f32 to vector<16x128xf32>
    %7 = arith.mulf %6, %5 : vector<16x128xf32>
    %cst_6 = arith.constant 0.707106769 : f32
    %8 = vector.broadcast %cst_6 : f32 to vector<16x128xf32>
    %9 = arith.mulf %5, %8 : vector<16x128xf32>
    %10 = math.erf %9 : vector<16x128xf32>
    %cst_7 = arith.constant 1.000000e+00 : f32
    %11 = vector.broadcast %cst_7 : f32 to vector<16x128xf32>
    %12 = arith.addf %11, %10 : vector<16x128xf32>
    %13 = arith.mulf %7, %12 : vector<16x128xf32>
    %c0_8 = arith.constant 0 : index
    %c0_9 = arith.constant 0 : index
    %14 = vector.load %arg4[%c0_8, %c0_9] : memref<128x128xf32, #tpu.memory_space<vmem>>, vector<128x128xf32>
    %cst_10 = arith.constant dense<0.000000e+00> : vector<16x128xf32>
    %15 = tpu.matmul %13, %14, %cst_10 {dimension_numbers = #tpu.dot_dimension_numbers<[1], [0], [0], [1], [0, 0, 1, 1], [], []>} : vector<16x128xf32>, vector<128x128xf32>, vector<16x128xf32> -> vector<16x128xf32>
    %c0_11 = arith.constant 0 : index
    %c0_12 = arith.constant 0 : index
    %16 = vector.load %arg5[%c0_11, %c0_12] : memref<1x128xf32, #tpu.memory_space<vmem>>, vector<1x128xf32>
    %17 = vector.broadcast %16 : vector<1x128xf32> to vector<16x128xf32>
    %18 = arith.addf %15, %17 : vector<16x128xf32>
    %c0_13 = arith.constant 0 : index
    %c0_14 = arith.constant 0 : index
    %19 = vector.load %arg6[%c0_13, %c0_14] : memref<16x128xf32, #tpu.memory_space<vmem>>, vector<16x128xf32>
    tpu.vector_store %arg6[%c0_13, %c0_14], %18 {strides = array<i32>} : memref<16x128xf32, #tpu.memory_space<vmem>>, vector<16x128xf32>,
    return
  }
  func.func @transform_0(%arg0: i32) -> (i32, i32) {
    %c0_i32 = arith.constant 0 : i32
    %c0_i32_0 = arith.constant 0 : i32
    return %arg0, %c0_i32 : i32, i32
  }
  func.func @transform_1(%arg0: i32) -> (i32, i32) {
    %c0_i32 = arith.constant 0 : i32
    %c0_i32_0 = arith.constant 0 : i32
    %c0_i32_1 = arith.constant 0 : i32
    return %c0_i32, %c0_i32_0 : i32, i32
  }
  func.func @transform_2(%arg0: i32) -> (i32, i32) {
    %c0_i32 = arith.constant 0 : i32
    %c0_i32_0 = arith.constant 0 : i32
    %c0_i32_1 = arith.constant 0 : i32
    return %c0_i32, %c0_i32_0 : i32, i32
  }
  func.func @transform_3(%arg0: i32) -> (i32, i32) {
    %c0_i32 = arith.constant 0 : i32
    %c0_i32_0 = arith.constant 0 : i32
    %c0_i32_1 = arith.constant 0 : i32
    return %c0_i32, %c0_i32_0 : i32, i32
  }
  func.func @transform_4(%arg0: i32) -> (i32, i32) {
    %c0_i32 = arith.constant 0 : i32
    %c0_i32_0 = arith.constant 0 : i32
    %c0_i32_1 = arith.constant 0 : i32
    return %c0_i32, %c0_i32_0 : i32, i32
  }
  func.func @transform_5(%arg0: i32) -> (i32, i32) {
    %c0_i32 = arith.constant 0 : i32
    %c0_i32_0 = arith.constant 0 : i32
    return %arg0, %c0_i32 : i32, i32
  }
}

</mosaic_0001>

<llo_original>
// kernel: adapter_v2_forward.1
$region0: #{adapter_v2_forward.1}
  #allocation0 [shape = 'u32[]', space=smem, size = 0x4, offset = 0x4, fixed_abs, tag = 'smem constant byte address 0x4 - core index']
  #allocation1 [shape = 'u32[144,128]{1,0:T(1,128)}', space=vmem, size = 0x12000, scoped, tag = 'internal scratch']
  %s0 = inlined_call_operand.hbm [shape: f32[16,32], index: 0, kind: input, shape index: {}]
  %s1 = inlined_call_operand.hbm [shape: f32[32,128], index: 1, kind: input, shape index: {}]
  %s2 = inlined_call_operand.vmem [shape: f32[1,128], index: 2, kind: input, shape index: {}]
  %s3 = inlined_call_operand.hbm [shape: f32[128,128], index: 3, kind: input, shape index: {}]
  %s4 = inlined_call_operand.vmem [shape: f32[1,128], index: 4, kind: input, shape index: {}]
  %s5 = inlined_call_operand.vmem [shape: f32[16,128], index: 5, kind: output, shape index: {}]
  %s6 = sld [smem:[#allocation0]]
  $region42: #{adapter_v2_forward.1} parent=0
    _
  %s8 = ssub.s32 1, %s6
  %s9 = scalar_select 0, %s8, %s6
  $region1: #{adapter_v2_forward.1} parent=0
    #allocation2 [shape = 'u8[8192]{0}', space=vmem, size = 0x2000, scoped, tag = 'input window, operand 0, single buffered']
    #allocation3 [shape = 's32[1]{0}', space=sflag, size = 0x4, scoped, tag = 'scoped memory for adapter_v2_forward.1']
    #allocation4 [shape = 'u8[16384]{0}', space=vmem, size = 0x4000, scoped, tag = 'input window, operand 1, single buffered']
    #allocation5 [shape = 's32[1]{0}', space=sflag, size = 0x4, scoped, tag = 'scoped memory for adapter_v2_forward.1']
    #allocation6 [shape = 'u8[65536]{0}', space=vmem, size = 0x10000, scoped, tag = 'input window, operand 3, single buffered']
    %10 = vsyncpa [#allocation3], 0
    %11 = vsyncpa [#allocation5], 0
    // Predicated region
    $region2: #{adapter_v2_forward.1} parent=1 // pred_check
      _
    $region3: #{adapter_v2_forward.1} parent=1 // pred_check_branch
      %13 = sbr.rel (0) target = $region5
    $region4: #{adapter_v2_forward.1} parent=1 // pred_region
      %s15 = ssub.s32 256, 256
      %16 = vsyncadd [#allocation3], %s15
      %s17 = sshll.u32 [#allocation2], 4
      %s18 = int_to_ptr.vmem [resolvable:$true] %s17
      %23 = dma.hbm_to_vmem [thread:$0]  %s0, 256, %s18, [#allocation3], 128, 128, 8
    $region5: #{adapter_v2_forward.1} parent=1 // pred_fallthru
      _
    // Predicated region
    $region6: #{adapter_v2_forward.1} parent=1 // pred_check
      _
    $region7: #{adapter_v2_forward.1} parent=1 // pred_check_branch
      %25 = sbr.rel (0) target = $region9
    $region8: #{adapter_v2_forward.1} parent=1 // pred_region
      %s27 = ssub.s32 512, 512
      %28 = vsyncadd [#allocation5], %s27
      %s29 = sshll.u32 [#allocation4], 4
      %s30 = int_to_ptr.vmem [resolvable:$true] %s29
      %35 = dma.hbm_to_vmem [thread:$0]  %s1, 512, %s30, [#allocation5], 128, 128, 8
    $region9: #{adapter_v2_forward.1} parent=1 // pred_fallthru
      _
    // Predicated region
    $region10: #{adapter_v2_forward.1} parent=1 // pred_check
      _
    $region11: #{adapter_v2_forward.1} parent=1 // pred_check_branch
      %37 = sbr.rel (0) target = $region13
    $region12: #{adapter_v2_forward.1} parent=1 // pred_region
      _
    $region13: #{adapter_v2_forward.1} parent=1 // pred_fallthru
      _
    // Predicated region
    $region14: #{adapter_v2_forward.1} parent=1 // pred_check
      _
    $region15: #{adapter_v2_forward.1} parent=1 // pred_check_branch
      %39 = sbr.rel (0) target = $region17
    $region16: #{adapter_v2_forward.1} parent=1 // pred_region
      %s41 = ssub.s32 2048, 2048
      %42 = vsyncadd [#allocation5], %s41
      %s43 = sshll.u32 [#allocation6], 4
      %s44 = int_to_ptr.vmem [resolvable:$true] %s43
      %49 = dma.hbm_to_vmem [thread:$0]  %s3, 2048, %s44, [#allocation5], 128, 128, 8
    $region17: #{adapter_v2_forward.1} parent=1 // pred_fallthru
      _
    // Predicated region
    $region18: #{adapter_v2_forward.1} parent=1 // pred_check
      _
    $region19: #{adapter_v2_forward.1} parent=1 // pred_check_branch
      %51 = sbr.rel (0) target = $region21
    $region20: #{adapter_v2_forward.1} parent=1 // pred_region
      _
    $region21: #{adapter_v2_forward.1} parent=1 // pred_fallthru
      _
    // Predicated region
    $region22: #{adapter_v2_forward.1} parent=1 // pred_check
      _
    $region23: #{adapter_v2_forward.1} parent=1 // pred_check_branch
      %53 = sbr.rel (0) target = $region25
    $region24: #{adapter_v2_forward.1} parent=1 // pred_region
      %54 = dma.done [#allocation3], 256
    $region25: #{adapter_v2_forward.1} parent=1 // pred_fallthru
      _
    // Predicated region
    $region26: #{adapter_v2_forward.1} parent=1 // pred_check
      _
    $region27: #{adapter_v2_forward.1} parent=1 // pred_check_branch
      %56 = sbr.rel (0) target = $region29
    $region28: #{adapter_v2_forward.1} parent=1 // pred_region
      %57 = dma.done [#allocation5], 512
    $region29: #{adapter_v2_forward.1} parent=1 // pred_fallthru
      _
    // Predicated region
    $region30: #{adapter_v2_forward.1} parent=1 // pred_check
      _
    $region31: #{adapter_v2_forward.1} parent=1 // pred_check_branch
      %59 = sbr.rel (0) target = $region33
    $region32: #{adapter_v2_forward.1} parent=1 // pred_region
      %60 = dma.done [#allocation5], 2048
    $region33: #{adapter_v2_forward.1} parent=1 // pred_fallthru
      _
    %v61 = vld [vmem:[#allocation2] sm:$0xff]
    %v62 = vld [vmem:[#allocation2 + $0x8] sm:$0xff]
    %v63 = vld [vmem:[#allocation4] sm:$0xff]
    %v64 = vld [vmem:[#allocation4 + $0x8] sm:$0xff]
    %v65 = vld [vmem:[#allocation4 + $0x10] sm:$0xff]
    %v66 = vld [vmem:[#allocation4 + $0x18] sm:$0xff]
    %v67 = vld [vmem:[%s2] sm:$0x1]
    %v69 = vlaneseq
    %v70 = vshrl.u32 %v69, 7
    %v71 = vsub.s32 0, %v70
    %v72 = vrot.slane %v67, %v71
    %vm74 = vcmask 261120
    %v76 = vsel %vm74, %v61, 0
    %v79 = vsel %vm74, %v62, 0
    %81 = vmatprep.subr.mxu0 0.0
    %82 = vmatpush1.msra.mxu0 %v63
    %83 = vmatprep.subr.mxu0 0.0
    %84 = vmatpush1.msra.mxu0 %v64
    %85 = vmatprep.subr.mxu0 0.0
    %86 = vmatpush1.msra.mxu0 %v65
    %87 = vmatprep.subr.mxu0 0.0
    %88 = vmatpush1.msra.mxu0 %v66
    %89 = vmatprep.subr.mxu0 0.0
    %90 = vmatpush1.msra.mxu0 0.0
    %91 = vmatprep.subr.mxu0 0.0
    %92 = vmatpush1.msra.mxu0 0.0
    %93 = vmatprep.subr.mxu0 0.0
    %94 = vmatpush1.msra.mxu0 0.0
    %95 = vmatprep.subr.mxu0 0.0
    %96 = vmatpush1.msra.mxu0 0.0
    %97 = vmatprep.subr.mxu0 0.0
    %98 = vmatpush1.msra.mxu0 0.0
    %99 = vmatprep.subr.mxu0 0.0
    %100 = vmatpush1.msra.mxu0 0.0
    %101 = vmatprep.subr.mxu0 0.0
    %102 = vmatpush1.msra.mxu0 0.0
    %103 = vmatprep.subr.mxu0 0.0
    %104 = vmatpush1.msra.mxu0 0.0
    %105 = vmatprep.subr.mxu0 0.0
    %106 = vmatpush1.msra.mxu0 0.0
    %107 = vmatprep.subr.mxu0 0.0
    %108 = vmatpush1.msra.mxu0 0.0
    %109 = vmatprep.subr.mxu0 0.0
    %110 = vmatpush1.msra.mxu0 0.0
    %111 = vmatprep.subr.mxu0 0.0
    %112 = vmatpush1.msra.mxu0 0.0
    %113 = vmatprep.subr.mxu0 0.0
    %114 = vmatpush1.msra.mxu0 0.0
    %115 = vmatprep.subr.mxu0 0.0
    %116 = vmatpush1.msra.mxu0 0.0
    %117 = vmatprep.subr.mxu0 0.0
    %118 = vmatpush1.msra.mxu0 0.0
    %119 = vmatprep.subr.mxu0 0.0
    %120 = vmatpush1.msra.mxu0 0.0
    %121 = vmatprep.subr.mxu0 0.0
    %122 = vmatpush1.msra.mxu0 0.0
    %123 = vmatprep.subr.mxu0 0.0
    %124 = vmatpush1.msra.mxu0 0.0
    %125 = vmatprep.subr.mxu0 0.0
    %126 = vmatpush1.msra.mxu0 0.0
    %127 = vmatprep.subr.mxu0 0.0
    %128 = vmatpush1.msra.mxu0 0.0
    %129 = vmatprep.subr.mxu0 0.0
    %130 = vmatpush1.msra.mxu0 0.0
    %131 = vmatprep.subr.mxu0 0.0
    %132 = vmatpush1.msra.mxu0 0.0
    %133 = vmatprep.subr.mxu0 0.0
    %134 = vmatpush1.msra.mxu0 0.0
    %135 = vmatprep.subr.mxu0 0.0
    %136 = vmatpush1.msra.mxu0 0.0
    %137 = vmatprep.subr.mxu0 0.0
    %138 = vmatpush1.msra.mxu0 0.0
    %139 = vmatprep.subr.mxu0 0.0
    %140 = vmatpush1.msra.mxu0 0.0
    %141 = vmatprep.subr.mxu0 0.0
    %142 = vmatpush1.msra.mxu0 0.0
    %143 = vmatprep.subr.mxu0 0.0
    %144 = vmatpush1.msra.mxu0 0.0
    %145 = vmatprep.mubr.f32.mxu0 0.0
    %146 = vmatmul.mubr.f32.gmra.mrb[0].mxu0 %v76
    %v147 = vpop.f32.mrb[0].mxu0
    %v148 = vadd.f32 %v72, %v147
    %v149 = vpop.f32.mrb[0].mxu0
    %150 = vmatprep.mubr.f32.mxu0 0.0
    %151 = vmatmul.mubr.f32.gmra.mrb[0].mxu0 %v79
    %v152 = vpop.f32.mrb[0].mxu0
    %v153 = vadd.f32 %v72, %v152
    %v154 = vpop.f32.mrb[0].mxu0
    %155 = vdwg.mxu0
    %v156 = vmul.f32 %v148, 0.5
    %v157 = vmul.f32 %v153, 0.5
    %v158 = vmul.f32 %v148, 0.70710677
    %v159 = vmul.f32 %v153, 0.70710677
    %v160 = verf.f32.pop %v158
    %v161 = verf.f32.pop %v159
    %v162 = vadd.f32 %v160, 1.0
    %v163 = vadd.f32 %v161, 1.0
    %v164 = vmul.f32 %v156, %v162
    %v165 = vmul.f32 %v157, %v163
    %v166 = vld [vmem:[#allocation6] sm:$0xff]
    %v167 = vld [vmem:[#allocation6 + $0x8] sm:$0xff]
    %v168 = vld [vmem:[#allocation6 + $0x10] sm:$0xff]
    %v169 = vld [vmem:[#allocation6 + $0x18] sm:$0xff]
    %v170 = vld [vmem:[#allocation6 + $0x20] sm:$0xff]
    %v171 = vld [vmem:[#allocation6 + $0x28] sm:$0xff]
    %v172 = vld [vmem:[#allocation6 + $0x30] sm:$0xff]
    %v173 = vld [vmem:[#allocation6 + $0x38] sm:$0xff]
    %v174 = vld [vmem:[#allocation6 + $0x40] sm:$0xff]
    %v175 = vld [vmem:[#allocation6 + $0x48] sm:$0xff]
    %v176 = vld [vmem:[#allocation6 + $0x50] sm:$0xff]
    %v177 = vld [vmem:[#allocation6 + $0x58] sm:$0xff]
    %v178 = vld [vmem:[#allocation6 + $0x60] sm:$0xff]
    %v179 = vld [vmem:[#allocation6 + $0x68] sm:$0xff]
    %v180 = vld [vmem:[#allocation6 + $0x70] sm:$0xff]
    %v181 = vld [vmem:[#allocation6 + $0x78] sm:$0xff]
    %v182 = vld [vmem:[%s4] sm:$0x1]
    %v184 = vlaneseq
    %v185 = vshrl.u32 %v184, 7
    %v186 = vsub.s32 0, %v185
    %v187 = vrot.slane %v182, %v186
    %189 = vmatprep.subr.mxu0 0.0
    %190 = vmatpush1.msra.mxu0 %v166
    %191 = vmatprep.subr.mxu0 0.0
    %192 = vmatpush1.msra.mxu0 %v167
    %193 = vmatprep.subr.mxu0 0.0
    %194 = vmatpush1.msra.mxu0 %v168
    %195 = vmatprep.subr.mxu0 0.0
    %196 = vmatpush1.msra.mxu0 %v169
    %197 = vmatprep.subr.mxu0 0.0
    %198 = vmatpush1.msra.mxu0 %v170
    %199 = vmatprep.subr.mxu0 0.0
    %200 = vmatpush1.msra.mxu0 %v171
    %201 = vmatprep.subr.mxu0 0.0
    %202 = vmatpush1.msra.mxu0 %v172
    %203 = vmatprep.subr.mxu0 0.0
    %204 = vmatpush1.msra.mxu0 %v173
    %205 = vmatprep.subr.mxu0 0.0
    %206 = vmatpush1.msra.mxu0 %v174
    %207 = vmatprep.subr.mxu0 0.0
    %208 = vmatpush1.msra.mxu0 %v175
    %209 = vmatprep.subr.mxu0 0.0
    %210 = vmatpush1.msra.mxu0 %v176
    %211 = vmatprep.subr.mxu0 0.0
    %212 = vmatpush1.msra.mxu0 %v177
    %213 = vmatprep.subr.mxu0 0.0
    %214 = vmatpush1.msra.mxu0 %v178
    %215 = vmatprep.subr.mxu0 0.0
    %216 = vmatpush1.msra.mxu0 %v179
    %217 = vmatprep.subr.mxu0 0.0
    %218 = vmatpush1.msra.mxu0 %v180
    %219 = vmatprep.subr.mxu0 0.0
    %220 = vmatpush1.msra.mxu0 %v181
    %221 = vmatprep.subr.mxu0 0.0
    %222 = vmatpush1.msra.mxu0 0.0
    %223 = vmatprep.subr.mxu0 0.0
    %224 = vmatpush1.msra.mxu0 0.0
    %225 = vmatprep.subr.mxu0 0.0
    %226 = vmatpush1.msra.mxu0 0.0
    %227 = vmatprep.subr.mxu0 0.0
    %228 = vmatpush1.msra.mxu0 0.0
    %229 = vmatprep.subr.mxu0 0.0
    %230 = vmatpush1.msra.mxu0 0.0
    %231 = vmatprep.subr.mxu0 0.0
    %232 = vmatpush1.msra.mxu0 0.0
    %233 = vmatprep.subr.mxu0 0.0
    %234 = vmatpush1.msra.mxu0 0.0
    %235 = vmatprep.subr.mxu0 0.0
    %236 = vmatpush1.msra.mxu0 0.0
    %237 = vmatprep.subr.mxu0 0.0
    %238 = vmatpush1.msra.mxu0 0.0
    %239 = vmatprep.subr.mxu0 0.0
    %240 = vmatpush1.msra.mxu0 0.0
    %241 = vmatprep.subr.mxu0 0.0
    %242 = vmatpush1.msra.mxu0 0.0
    %243 = vmatprep.subr.mxu0 0.0
    %244 = vmatpush1.msra.mxu0 0.0
    %245 = vmatprep.subr.mxu0 0.0
    %246 = vmatpush1.msra.mxu0 0.0
    %247 = vmatprep.subr.mxu0 0.0
    %248 = vmatpush1.msra.mxu0 0.0
    %249 = vmatprep.subr.mxu0 0.0
    %250 = vmatpush1.msra.mxu0 0.0
    %251 = vmatprep.subr.mxu0 0.0
    %252 = vmatpush1.msra.mxu0 0.0
    %253 = vmatprep.mubr.f32.mxu0 0.0
    %254 = vmatmul.mubr.f32.gmra.mrb[0].mxu0 %v164
    %v255 = vpop.f32.mrb[0].mxu0
    %v256 = vadd.f32 %v187, %v255
    %v257 = vpop.f32.mrb[0].mxu0
    %258 = vmatprep.mubr.f32.mxu0 0.0
    %259 = vmatmul.mubr.f32.gmra.mrb[0].mxu0 %v165
    %v260 = vpop.f32.mrb[0].mxu0
    %v261 = vadd.f32 %v187, %v260
    %v262 = vpop.f32.mrb[0].mxu0
    %263 = vdwg.mxu0
    %264 = vst [vmem:[%s5] sm:$0xff] %v256
    %265 = vst [vmem:[%s5 + $0x8] sm:$0xff] %v261
    // Predicated region
    $region34: #{adapter_v2_forward.1} parent=1 // pred_check
      _
    $region35: #{adapter_v2_forward.1} parent=1 // pred_check_branch
      %267 = sbr.rel (0) target = $region37
    $region36: #{adapter_v2_forward.1} parent=1 // pred_region
      _
    $region37: #{adapter_v2_forward.1} parent=1 // pred_fallthru
      _
    // Predicated region
    $region38: #{adapter_v2_forward.1} parent=1 // pred_check
      _
    $region39: #{adapter_v2_forward.1} parent=1 // pred_check_branch
      %269 = sbr.rel (0) target = $region41
    $region40: #{adapter_v2_forward.1} parent=1 // pred_region
      _
    $region41: #{adapter_v2_forward.1} parent=1 // pred_fallthru
      _
    %270 = vsyncpa [#allocation3], 1
    %271 = vsyncpa [#allocation5], 1

</llo_original>
